<compile_context>
chip_gen: v6e
topology: v6e:2x2x1
jax: 0.10.0
libtpu: 0.0.40
codegen_flags: <defaults>
</compile_context>

<pallas_src>
import jax
import jax.numpy as jnp
from jax.experimental import pallas as pl
from jax.experimental.pallas import tpu as pltpu

_LANE_CAP = 2048          # max lane-dense last dim (multiple of 128)
_FALLBACK_LANE_W = 1024   # used only when padding is unavoidable


def _round_up(a, b):
    return -(-a // b) * b


def _cdiv(a, b):
    return -(-a // b)


def _vmem_capacity_bytes():
    try:
        return int(getattr(pltpu.get_tpu_info(), "vmem_capacity_bytes", 128 << 20))
    except Exception:
        return 128 << 20


def _gain_kernel(gain_ref, x_ref, o_ref):
    # gain_ref: (1,) fp32 scalar in SMEM; x_ref / o_ref: (tile_r, lane_w) VMEM tiles.
    # Multiply in f32 (fp32 parameter semantics); only the product is cast.
    o_ref[...] = (x_ref[...].astype(jnp.float32) * gain_ref[0]).astype(o_ref.dtype)


def _pick_lane_w(total):
    """Largest multiple-of-128 width (<= _LANE_CAP) dividing `total`.

    A dividing width makes reshape(rows, lane_w) a free view -> no jnp.pad /
    output-slice round-trips (each of those is an extra full-array HBM pass).
    Returns None when no such width exists.
    """
    for w in range(_LANE_CAP, 127, -128):
        if total % w == 0:
            return w
    return None


def _pick_tile_rows(rows, lane_w, itemsize, vmem_cap):
    """Dtype- and generation-aware row-tile size (multiple of 8 sublanes)."""
    if rows <= 8:
        return rows                        # one full block (block dims == array dims)
    # ~8 MiB tiles on 128 MiB-VMEM chips (v5e/v6e), ~4 MiB on v7x (64 MiB VMEM).
    # Double-buffered in+out => 4x tile bytes, kept well inside the raised limit.
    target_bytes = min(8 << 20, vmem_cap // 16)
    by_bytes = max(32, (target_bytes // (lane_w * itemsize)) // 32 * 32)
    # Keep grid length >= 2 so v7x's two TensorCores both get work (no-op elsewhere).
    by_split = _round_up(_cdiv(rows, 2), 8)
    return max(8, min(by_bytes, by_split))


def gain_forward(x, gain):
    """Forward of the Gain module: x * gain, for x of arbitrary shape."""
    orig_shape = x.shape
    total = x.size
    itemsize = x.dtype.itemsize
    vmem_cap = _vmem_capacity_bytes()

    lane_w = _pick_lane_w(total)
    if lane_w is not None:
        rows = total // lane_w
        x2d = x.reshape(rows, lane_w)      # free view, no padding
        pad = 0
    else:
        # Fallback: pad the flat array; rows padded only to a sublane multiple (8).
        lane_w = _FALLBACK_LANE_W
        rows = _round_up(_cdiv(total, lane_w), 8)
        pad = rows * lane_w - total
        x2d = jnp.pad(x.reshape(-1), (0, pad)).reshape(rows, lane_w)

    tile_r = _pick_tile_rows(rows, lane_w, itemsize, vmem_cap)
    grid = (_cdiv(rows, tile_r),)          # partial last block handled by masking

    gain_arr = jnp.asarray(gain, dtype=jnp.float32).reshape((1,))
    vmem_limit = int(min(64 << 20, vmem_cap // 2))   # 64 MiB v5e/v6e, 32 MiB v7x

    out2d = pl.pallas_call(
        _gain_kernel,
        out_shape=jax.ShapeDtypeStruct(x2d.shape, x.dtype),
        grid=grid,
        in_specs=[
            pl.BlockSpec(memory_space=pltpu.MemorySpace.SMEM),   # scalar gain
            pl.BlockSpec((tile_r, lane_w), lambda i: (i, 0)),    # input row tiles
        ],
        out_specs=pl.BlockSpec((tile_r, lane_w), lambda i: (i, 0)),
        compiler_params=pltpu.CompilerParams(
            dimension_semantics=("parallel",),   # v7x: shard rows across both TCs
            vmem_limit_bytes=vmem_limit,
        ),
    )(gain_arr, x2d)

    if pad:
        return out2d.reshape(-1)[:total].reshape(orig_shape)
    return out2d.reshape(orig_shape)


if __name__ == "__main__":
    key = jax.random.PRNGKey(0)
    x = jax.random.normal(key, (2, 4, 16, 16), dtype=jnp.float32)

    # Parameter exactly as in the module's __init__: scalar initialized to 0.0.
    gain_param = jnp.float32(0.0)
    out = gain_forward(x, gain_param)
    jax.block_until_ready(out)
    assert out.shape == x.shape and out.dtype == x.dtype
    assert jnp.allclose(out, jnp.zeros_like(x))

    # Non-trivial gain value.
    out2 = gain_forward(x, jnp.float32(1.7))
    jax.block_until_ready(out2)
    assert jnp.allclose(out2, x * 1.7, atol=1e-6)

    # bf16 activations with the fp32 parameter (product cast back to bf16).
    xb = x.astype(jnp.bfloat16)
    out3 = gain_forward(xb, jnp.float32(0.5))
    jax.block_until_ready(out3)
    assert out3.dtype == jnp.bfloat16
    assert jnp.allclose(out3.astype(jnp.float32),
                        xb.astype(jnp.float32) * 0.5, atol=1e-2)

    # Size with no multiple-of-128 factor -> exercises the padded fallback path.
    xo = jax.random.normal(jax.random.PRNGKey(1), (3, 5, 7), dtype=jnp.float32)
    out4 = gain_forward(xo, jnp.float32(-2.25))
    jax.block_until_ready(out4)
    assert out4.shape == xo.shape
    assert jnp.allclose(out4, xo * -2.25, atol=1e-6)

    print("KERNEL_OK")
</pallas_src>

<mosaic_0001>
module attributes {stable_mosaic.version = 11 : i64} {
  func.func @_gain_kernel(%arg0: i32, %arg1: memref<1xf32, #tpu.memory_space<smem>>, %arg2: memref<1x2048xf32, #tpu.memory_space<vmem>>, %arg3: memref<1x2048xf32, #tpu.memory_space<vmem>>) attributes {dimension_semantics = [#tpu.dimension_semantics<parallel>], iteration_bounds = array<i64: 1>, scalar_prefetch = 0 : i64, scratch_operands = 0 : i64, tpu.core_type = #tpu.core_type<tc>, window_params = [{transform_indices = @transform_0, window_bounds = array<i64: 1>}, {transform_indices = @transform_1, window_bounds = array<i64: 1, 2048>}, {transform_indices = @transform_2, window_bounds = array<i64: 1, 2048>}]} {
    %c0 = arith.constant 0 : index
    %c0_0 = arith.constant 0 : index
    %0 = vector.load %arg2[%c0, %c0_0] : memref<1x2048xf32, #tpu.memory_space<vmem>>, vector<1x2048xf32>
    %c0_1 = arith.constant 0 : index
    %1 = memref.load %arg1[%c0_1] : memref<1xf32, #tpu.memory_space<smem>>
    %2 = vector.broadcast %1 : f32 to vector<1x2048xf32>
    %3 = arith.mulf %0, %2 : vector<1x2048xf32>
    %c0_2 = arith.constant 0 : index
    %c0_3 = arith.constant 0 : index
    %4 = vector.load %arg3[%c0_2, %c0_3] : memref<1x2048xf32, #tpu.memory_space<vmem>>, vector<1x2048xf32>
    tpu.vector_store %arg3[%c0_2, %c0_3], %3 {strides = array<i32>} : memref<1x2048xf32, #tpu.memory_space<vmem>>, vector<1x2048xf32>,
    return
  }
  func.func @transform_0(%arg0: i32) -> i32 {
    %c0_i32 = arith.constant 0 : i32
    %c0_i32_0 = arith.constant 0 : i32
    return %c0_i32 : i32
  }
  func.func @transform_1(%arg0: i32) -> (i32, i32) {
    %c0_i32 = arith.constant 0 : i32
    %c0_i32_0 = arith.constant 0 : i32
    return %arg0, %c0_i32 : i32, i32
  }
  func.func @transform_2(%arg0: i32) -> (i32, i32) {
    %c0_i32 = arith.constant 0 : i32
    %c0_i32_0 = arith.constant 0 : i32
    return %arg0, %c0_i32 : i32, i32
  }
}

</mosaic_0001>

<llo_original>
// kernel: tpu_custom_call.1
$region0: #{tpu_custom_call.1}
  #allocation0 [shape = 'u32[]', space=smem, size = 0x4, offset = 0x4, fixed_abs, tag = 'smem constant byte address 0x4 - core index']
  #allocation1 [shape = 'u32[144,128]{1,0:T(1,128)}', space=vmem, size = 0x12000, scoped, tag = 'internal scratch']
  #allocation2 [shape = 'f32[1]{0:T(128)S(6)}', space=smem, size = 0x200, scoped, tag = 'scoped memory for tpu_custom_call.1']
  %s0 = inlined_call_operand.<no memory space> [shape: f32[1], index: 0, kind: input, shape index: {}]
  %s1 = inlined_call_operand.hbm [shape: f32[1,2048], index: 1, kind: input, shape index: {}]
  %s2 = inlined_call_operand.hbm [shape: f32[1,2048], index: 2, kind: output, shape index: {}]
  %s3 = sld [smem:[#allocation0]]
  $region22: #{tpu_custom_call.1} parent=0
    _
  %s5 = ssub.s32 1, %s3
  %s6 = scalar_select 0, %s5, %s3
  %7 = sst [smem:[#allocation2]] %s0
  $region1: #{tpu_custom_call.1} parent=0
    #allocation3 [shape = 'u8[8192]{0}', space=vmem, size = 0x2000, scoped, tag = 'input window, operand 1, single buffered']
    #allocation4 [shape = 's32[1]{0}', space=sflag, size = 0x4, scoped, tag = 'scoped memory for tpu_custom_call.1']
    #allocation5 [shape = 's32[1]{0}', space=sflag, size = 0x4, scoped, tag = 'scoped memory for tpu_custom_call.1']
    #allocation6 [shape = 'u8[8192]{0}', space=vmem, size = 0x2000, scoped, tag = 'output window, operand 0, single buffered']
    %8 = vsyncpa [#allocation4], 0
    %9 = vsyncpa [#allocation5], 0
    // Predicated region
    $region2: #{tpu_custom_call.1} parent=1 // pred_check
      _
    $region3: #{tpu_custom_call.1} parent=1 // pred_check_branch
      %11 = sbr.rel (0) target = $region5
    $region4: #{tpu_custom_call.1} parent=1 // pred_region
      _
    $region5: #{tpu_custom_call.1} parent=1 // pred_fallthru
      _
    // Predicated region
    $region6: #{tpu_custom_call.1} parent=1 // pred_check
      _
    $region7: #{tpu_custom_call.1} parent=1 // pred_check_branch
      %13 = sbr.rel (0) target = $region9
    $region8: #{tpu_custom_call.1} parent=1 // pred_region
      %s15 = ssub.s32 256, 256
      %16 = vsyncadd [#allocation4], %s15
      %s18 = sshll.u32 [#allocation3], 4
      %s19 = int_to_ptr.vmem [resolvable:$true] %s18
      %21 = dma.hbm_to_vmem [thread:$0]  %s1, 256, %s19, [#allocation4]
    $region9: #{tpu_custom_call.1} parent=1 // pred_fallthru
      _
    // Predicated region
    $region10: #{tpu_custom_call.1} parent=1 // pred_check
      _
    $region11: #{tpu_custom_call.1} parent=1 // pred_check_branch
      %23 = sbr.rel (0) target = $region13
    $region12: #{tpu_custom_call.1} parent=1 // pred_region
      %24 = dma.done [#allocation4], 256
    $region13: #{tpu_custom_call.1} parent=1 // pred_fallthru
      _
    %v25 = vld [vmem:[#allocation3] sm:$0xff]
    %v26 = vld [vmem:[#allocation3 + $0x8] sm:$0xff]
    %s27 = sld [smem:[#allocation2]]
    %v28 = vstv %s27
    %v29 = vmul.f32 %v25, %v28
    %v30 = vmul.f32 %v26, %v28
    %31 = vst [vmem:[#allocation6] sm:$0xff] %v29
    %32 = vst [vmem:[#allocation6 + $0x8] sm:$0xff] %v30
    // Predicated region
    $region14: #{tpu_custom_call.1} parent=1 // pred_check
      _
    $region15: #{tpu_custom_call.1} parent=1 // pred_check_branch
      %34 = sbr.rel (0) target = $region17
    $region16: #{tpu_custom_call.1} parent=1 // pred_region
      %s36 = ssub.s32 256, 256
      %37 = vsyncadd [#allocation5], %s36
      %s39 = sshll.u32 [#allocation6], 4
      %s40 = int_to_ptr.vmem [resolvable:$true] %s39
      %42 = dma.vmem_to_hbm [thread:$0]  %s40, 256, %s2, [#allocation5]
    $region17: #{tpu_custom_call.1} parent=1 // pred_fallthru
      _
    // Predicated region
    $region18: #{tpu_custom_call.1} parent=1 // pred_check
      _
    $region19: #{tpu_custom_call.1} parent=1 // pred_check_branch
      %44 = sbr.rel (0) target = $region21
    $region20: #{tpu_custom_call.1} parent=1 // pred_region
      %45 = dma.done [#allocation5], 256
    $region21: #{tpu_custom_call.1} parent=1 // pred_fallthru
      _
    %46 = vsyncpa [#allocation4], 1
    %47 = vsyncpa [#allocation5], 1

</llo_original>
